<compile_context>
chip_gen: v5e
topology: v5e:2x2
jax: 0.10.0
libtpu: 0.0.40
codegen_flags: <defaults>
</compile_context>

<pallas_src>
import functools

import jax
import jax.numpy as jnp
from jax import lax
from jax.experimental import pallas as pl
from jax.experimental.pallas import tpu as pltpu

BN_EPS = 1e-5
LANE = 128


# ---------------------------------------------------------------------------
# Pallas kernels
# ---------------------------------------------------------------------------
def _conv1x1_stats_kernel(x_ref, w_ref, y_ref, sum_ref, sq_ref):
    """1x1 conv as matmul; accumulates per-channel batch sum / sum-of-squares."""
    i = pl.program_id(0)
    y = jnp.dot(x_ref[...], w_ref[...], preferred_element_type=jnp.float32)

    @pl.when(i == 0)
    def _():
        sum_ref[...] = jnp.zeros_like(sum_ref)
        sq_ref[...] = jnp.zeros_like(sq_ref)

    sum_ref[...] += jnp.sum(y, axis=0, keepdims=True)
    sq_ref[...] += jnp.sum(y * y, axis=0, keepdims=True)
    y_ref[...] = y.astype(y_ref.dtype)


def _bnrelu_conv1x1_stats_kernel(x_ref, s_ref, b_ref, w_ref, y_ref, sum_ref, sq_ref):
    """(BN+ReLU of the previous stage) fused in, then 1x1 conv + batch stats."""
    i = pl.program_id(0)
    a = jnp.maximum(x_ref[...].astype(jnp.float32) * s_ref[...] + b_ref[...], 0.0)
    y = jnp.dot(a.astype(jnp.bfloat16), w_ref[...], preferred_element_type=jnp.float32)

    @pl.when(i == 0)
    def _():
        sum_ref[...] = jnp.zeros_like(sum_ref)
        sq_ref[...] = jnp.zeros_like(sq_ref)

    sum_ref[...] += jnp.sum(y, axis=0, keepdims=True)
    sq_ref[...] += jnp.sum(y * y, axis=0, keepdims=True)
    y_ref[...] = y.astype(y_ref.dtype)


def _bnrelu_dualconv1x1_stats_kernel(y2_ref, s2_ref, b2_ref, w3_ref, x_ref, wd_ref,
                                     y3_ref, yd_ref,
                                     s3sum_ref, s3sq_ref, sdsum_ref, sdsq_ref):
    """Fused conv3 (with BN2+ReLU on its input) and downsample 1x1 conv + stats."""
    i = pl.program_id(0)
    a2 = jnp.maximum(y2_ref[...].astype(jnp.float32) * s2_ref[...] + b2_ref[...], 0.0)
    y3 = jnp.dot(a2.astype(jnp.bfloat16), w3_ref[...], preferred_element_type=jnp.float32)
    yd = jnp.dot(x_ref[...], wd_ref[...], preferred_element_type=jnp.float32)

    @pl.when(i == 0)
    def _():
        s3sum_ref[...] = jnp.zeros_like(s3sum_ref)
        s3sq_ref[...] = jnp.zeros_like(s3sq_ref)
        sdsum_ref[...] = jnp.zeros_like(sdsum_ref)
        sdsq_ref[...] = jnp.zeros_like(sdsq_ref)

    s3sum_ref[...] += jnp.sum(y3, axis=0, keepdims=True)
    s3sq_ref[...] += jnp.sum(y3 * y3, axis=0, keepdims=True)
    sdsum_ref[...] += jnp.sum(yd, axis=0, keepdims=True)
    sdsq_ref[...] += jnp.sum(yd * yd, axis=0, keepdims=True)
    y3_ref[...] = y3.astype(y3_ref.dtype)
    yd_ref[...] = yd.astype(yd_ref.dtype)


def _conv3x3_stats_kernel(H, W, C, y1_ref, s1_ref, b1_ref, w2_ref,
                          y2_ref, sum_ref, sq_ref, pad_ref, acc_ref):
    """3x3 stride-1 pad-1 conv of one image with BN1+ReLU fused on its input.

    The conv is 9 shifted (H*W,C)x(C,C) MXU matmuls against a zero-padded halo
    buffer held in VMEM scratch -- no HBM im2col tensor is materialized.
    TODO(synk): for very large H*W, tile spatially (halo blocks) instead of
    one whole image per grid step.
    """
    n = pl.program_id(0)
    a1 = jnp.maximum(
        y1_ref[0].astype(jnp.float32) * s1_ref[...].reshape(1, 1, C)
        + b1_ref[...].reshape(1, 1, C), 0.0)

    pad_ref[...] = jnp.zeros_like(pad_ref)              # halo border = conv zero-pad
    pad_ref[1:H + 1, 1:W + 1, :] = a1.astype(pad_ref.dtype)

    acc_ref[...] = jnp.zeros_like(acc_ref)
    for t in range(9):                                   # unrolled: 9 MXU calls
        dy, dx = divmod(t, 3)
        tap = pad_ref[dy:dy + H, dx:dx + W, :].reshape(H * W, C)
        acc_ref[...] += jnp.dot(tap, w2_ref[t], preferred_element_type=jnp.float32)
    y2 = acc_ref[...]

    @pl.when(n == 0)
    def _():
        sum_ref[...] = jnp.zeros_like(sum_ref)
        sq_ref[...] = jnp.zeros_like(sq_ref)

    sum_ref[...] += jnp.sum(y2, axis=0, keepdims=True)
    sq_ref[...] += jnp.sum(y2 * y2, axis=0, keepdims=True)
    y2_ref[...] = y2.reshape(1, H, W, C).astype(y2_ref.dtype)


def _add_bn_relu_kernel(y3_ref, s3_ref, b3_ref, yd_ref, sd_ref, bd_ref, o_ref):
    """bn3(conv3) + bn_d(downsample conv) residual add + final ReLU."""
    y = y3_ref[...].astype(jnp.float32) * s3_ref[...] + b3_ref[...]
    ident = yd_ref[...].astype(jnp.float32) * sd_ref[...] + bd_ref[...]
    o_ref[...] = jnp.maximum(y + ident, 0.0)


def _add_identity_relu_kernel(y3_ref, s3_ref, b3_ref, x_ref, o_ref):
    """bn3(conv3) + identity residual add + final ReLU (no downsample branch)."""
    y = y3_ref[...].astype(jnp.float32) * s3_ref[...] + b3_ref[...]
    o_ref[...] = jnp.maximum(y + x_ref[...].astype(jnp.float32), 0.0)


# ---------------------------------------------------------------------------
# pallas_call wrappers
# ---------------------------------------------------------------------------
def _row_spec(tile_m, c):
    return pl.BlockSpec((tile_m, c), lambda i: (i, 0))


def _resident_spec(shape):
    nd = len(shape)
    return pl.BlockSpec(shape, lambda i: (0,) * nd)


def conv1x1_stats(x, w, tile_m):
    M, K = x.shape
    C = w.shape[1]
    return pl.pallas_call(
        _conv1x1_stats_kernel,
        grid=(M // tile_m,),
        in_specs=[_row_spec(tile_m, K), _resident_spec((K, C))],
        out_specs=[_row_spec(tile_m, C), _resident_spec((1, C)), _resident_spec((1, C))],
        out_shape=[jax.ShapeDtypeStruct((M, C), jnp.bfloat16),
                   jax.ShapeDtypeStruct((1, C), jnp.float32),
                   jax.ShapeDtypeStruct((1, C), jnp.float32)],
        compiler_params=pltpu.CompilerParams(dimension_semantics=("arbitrary",)),
    )(x, w)


def bnrelu_conv1x1_stats(x, scale, shift, w, tile_m):
    M, K = x.shape
    C = w.shape[1]
    return pl.pallas_call(
        _bnrelu_conv1x1_stats_kernel,
        grid=(M // tile_m,),
        in_specs=[_row_spec(tile_m, K), _resident_spec((1, K)), _resident_spec((1, K)),
                  _resident_spec((K, C))],
        out_specs=[_row_spec(tile_m, C), _resident_spec((1, C)), _resident_spec((1, C))],
        out_shape=[jax.ShapeDtypeStruct((M, C), jnp.bfloat16),
                   jax.ShapeDtypeStruct((1, C), jnp.float32),
                   jax.ShapeDtypeStruct((1, C), jnp.float32)],
        compiler_params=pltpu.CompilerParams(dimension_semantics=("arbitrary",)),
    )(x, scale, shift, w)


def bnrelu_dualconv1x1_stats(y2, scale2, shift2, w3, x, wd, tile_m):
    M, K2 = y2.shape
    C = w3.shape[1]
    Kx = x.shape[1]
    return pl.pallas_call(
        _bnrelu_dualconv1x1_stats_kernel,
        grid=(M // tile_m,),
        in_specs=[_row_spec(tile_m, K2), _resident_spec((1, K2)), _resident_spec((1, K2)),
                  _resident_spec((K2, C)),
                  _row_spec(tile_m, Kx), _resident_spec((Kx, C))],
        out_specs=[_row_spec(tile_m, C), _row_spec(tile_m, C),
                   _resident_spec((1, C)), _resident_spec((1, C)),
                   _resident_spec((1, C)), _resident_spec((1, C))],
        out_shape=[jax.ShapeDtypeStruct((M, C), jnp.bfloat16),
                   jax.ShapeDtypeStruct((M, C), jnp.bfloat16),
                   jax.ShapeDtypeStruct((1, C), jnp.float32),
                   jax.ShapeDtypeStruct((1, C), jnp.float32),
                   jax.ShapeDtypeStruct((1, C), jnp.float32),
                   jax.ShapeDtypeStruct((1, C), jnp.float32)],
        compiler_params=pltpu.CompilerParams(dimension_semantics=("arbitrary",)),
    )(y2, scale2, shift2, w3, x, wd)


def conv3x3_bnrelu_in_stats(y1_sp, scale1, shift1, w2_taps):
    N, H, W, C = y1_sp.shape
    return pl.pallas_call(
        functools.partial(_conv3x3_stats_kernel, H, W, C),
        grid=(N,),
        in_specs=[pl.BlockSpec((1, H, W, C), lambda n: (n, 0, 0, 0)),
                  _resident_spec((1, C)), _resident_spec((1, C)),
                  _resident_spec((9, C, C))],
        out_specs=[pl.BlockSpec((1, H, W, C), lambda n: (n, 0, 0, 0)),
                   _resident_spec((1, C)), _resident_spec((1, C))],
        out_shape=[jax.ShapeDtypeStruct((N, H, W, C), jnp.bfloat16),
                   jax.ShapeDtypeStruct((1, C), jnp.float32),
                   jax.ShapeDtypeStruct((1, C), jnp.float32)],
        scratch_shapes=[pltpu.VMEM((H + 2, W + 2, C), jnp.bfloat16),
                        pltpu.VMEM((H * W, C), jnp.float32)],
        compiler_params=pltpu.CompilerParams(dimension_semantics=("arbitrary",)),
    )(y1_sp, scale1, shift1, w2_taps)


def add_bn_relu(y3, scale3, shift3, yd, scaled, shiftd, tile_m):
    M, C = y3.shape
    return pl.pallas_call(
        _add_bn_relu_kernel,
        grid=(M // tile_m,),
        in_specs=[_row_spec(tile_m, C), _resident_spec((1, C)), _resident_spec((1, C)),
                  _row_spec(tile_m, C), _resident_spec((1, C)), _resident_spec((1, C))],
        out_specs=_row_spec(tile_m, C),
        out_shape=jax.ShapeDtypeStruct((M, C), jnp.float32),
        compiler_params=pltpu.CompilerParams(dimension_semantics=("parallel",)),
    )(y3, scale3, shift3, yd, scaled, shiftd)


def add_identity_relu(y3, scale3, shift3, x, tile_m):
    M, C = y3.shape
    return pl.pallas_call(
        _add_identity_relu_kernel,
        grid=(M // tile_m,),
        in_specs=[_row_spec(tile_m, C), _resident_spec((1, C)), _resident_spec((1, C)),
                  _row_spec(tile_m, C)],
        out_specs=_row_spec(tile_m, C),
        out_shape=jax.ShapeDtypeStruct((M, C), jnp.float32),
        compiler_params=pltpu.CompilerParams(dimension_semantics=("parallel",)),
    )(y3, scale3, shift3, x)


# ---------------------------------------------------------------------------
# Host-side glue: layout, lane padding, per-channel BN fold (tiny O(C) math)
# ---------------------------------------------------------------------------
def _rup(c, q=LANE):
    return ((c + q - 1) // q) * q


def _pad_to(a, shape):
    pads = [(0, t - s) for s, t in zip(a.shape, shape)]
    return jnp.pad(a, pads) if any(p for _, p in pads) else a


def _pick_tile_m(m):
    # Largest power-of-two row tile <= 512 dividing M with >= 2 grid steps.
    # TODO(synk): per-generation tile sizes (v5e/v6e can take 1024-2048 rows,
    # v7x should stay near 512 rows because VMEM is 64 MiB).
    for t in (512, 256, 128, 64, 32, 16, 8):
        if m % t == 0 and m // t >= 2:
            return t
    return m


def _bn_fold(ssum, ssq, count, gamma_p, beta_p):
    """Batch mean/var -> (scale, shift) so the in-kernel apply is one FMA/elt."""
    mean = ssum / count
    var = jnp.maximum(ssq / count - mean * mean, 0.0)   # guard f32 cancellation
    scale = gamma_p * lax.rsqrt(var + BN_EPS)
    shift = beta_p - mean * scale
    return scale, shift


def bottleneck_forward(x_nchw, params, down_sample):
    N, Cin, H, W = x_nchw.shape
    mid = params["w1"].shape[1]
    cout = params["w3"].shape[1]
    cin_p, mid_p, cout_p = _rup(Cin), _rup(mid), _rup(cout)
    M = N * H * W
    tile_m = _pick_tile_m(M)

    # NCHW -> NHWC -> (M, C); channel-pad to lane width; bf16 matmul operands.
    x_nhwc = jnp.transpose(x_nchw, (0, 2, 3, 1)).astype(jnp.float32)
    x2d = _pad_to(x_nhwc.reshape(M, Cin), (M, cin_p)).astype(jnp.bfloat16)

    w1 = _pad_to(params["w1"], (cin_p, mid_p)).astype(jnp.bfloat16)
    w2 = _pad_to(params["w2"].reshape(9, mid, mid), (9, mid_p, mid_p)).astype(jnp.bfloat16)
    w3 = _pad_to(params["w3"], (mid_p, cout_p)).astype(jnp.bfloat16)
    g1 = _pad_to(params["g1"].reshape(1, mid), (1, mid_p)).astype(jnp.float32)
    b1 = _pad_to(params["b1"].reshape(1, mid), (1, mid_p)).astype(jnp.float32)
    g2 = _pad_to(params["g2"].reshape(1, mid), (1, mid_p)).astype(jnp.float32)
    b2 = _pad_to(params["b2"].reshape(1, mid), (1, mid_p)).astype(jnp.float32)
    g3 = _pad_to(params["g3"].reshape(1, cout), (1, cout_p)).astype(jnp.float32)
    b3 = _pad_to(params["b3"].reshape(1, cout), (1, cout_p)).astype(jnp.float32)

    # conv1 (1x1) + batch-stat accumulation across row tiles.
    y1, s1sum, s1sq = conv1x1_stats(x2d, w1, tile_m)
    sc1, sh1 = _bn_fold(s1sum, s1sq, M, g1, b1)

    # conv2 (3x3, pad 1) with bn1+relu fused on its input, + batch stats.
    y2, s2sum, s2sq = conv3x3_bnrelu_in_stats(y1.reshape(N, H, W, mid_p), sc1, sh1, w2)
    sc2, sh2 = _bn_fold(s2sum, s2sq, M, g2, b2)
    y2_2d = y2.reshape(M, mid_p)

    if down_sample:
        wd = _pad_to(params["wd"], (cin_p, cout_p)).astype(jnp.bfloat16)
        gd = _pad_to(params["gd"].reshape(1, cout), (1, cout_p)).astype(jnp.float32)
        bd = _pad_to(params["bd"].reshape(1, cout), (1, cout_p)).astype(jnp.float32)
        # conv3 + downsample conv fused into one pass over the row tiles.
        y3, yd, s3sum, s3sq, sdsum, sdsq = bnrelu_dualconv1x1_stats(
            y2_2d, sc2, sh2, w3, x2d, wd, tile_m)
        sc3, sh3 = _bn_fold(s3sum, s3sq, M, g3, b3)
        scd, shd = _bn_fold(sdsum, sdsq, M, gd, bd)
        out2d = add_bn_relu(y3, sc3, sh3, yd, scd, shd, tile_m)
    else:
        y3, s3sum, s3sq = bnrelu_conv1x1_stats(y2_2d, sc2, sh2, w3, tile_m)
        sc3, sh3 = _bn_fold(s3sum, s3sq, M, g3, b3)
        out2d = add_identity_relu(y3, sc3, sh3, x2d, tile_m)

    out = out2d[:, :cout].reshape(N, H, W, cout)
    # TODO(synk): keep NHWC bf16 end-to-end if the caller allows; the transpose
    # below only exists to match the PyTorch NCHW layout contract.
    return jnp.transpose(out, (0, 3, 1, 2))


# ---------------------------------------------------------------------------
# Pure-JAX f32 reference (same train-mode BN math) for correctness check
# ---------------------------------------------------------------------------
def _bn_train(y, g, b):
    mean = y.mean(axis=(0, 1, 2), keepdims=True)
    var = ((y - mean) ** 2).mean(axis=(0, 1, 2), keepdims=True)
    return (y - mean) * lax.rsqrt(var + BN_EPS) * g + b


def reference_forward(x_nchw, params, down_sample):
    x = jnp.transpose(x_nchw, (0, 2, 3, 1)).astype(jnp.float32)
    h = jnp.einsum("nhwc,co->nhwo", x, params["w1"])
    h = jnp.maximum(_bn_train(h, params["g1"], params["b1"]), 0.0)
    h = lax.conv_general_dilated(h, params["w2"], (1, 1), "SAME",
                                 dimension_numbers=("NHWC", "HWIO", "NHWC"))
    h = jnp.maximum(_bn_train(h, params["g2"], params["b2"]), 0.0)
    h = jnp.einsum("nhwc,co->nhwo", h, params["w3"])
    h = _bn_train(h, params["g3"], params["b3"])
    if down_sample:
        i = jnp.einsum("nhwc,co->nhwo", x, params["wd"])
        i = _bn_train(i, params["gd"], params["bd"])
    else:
        i = x
    out = jnp.maximum(h + i, 0.0)
    return jnp.transpose(out, (0, 3, 1, 2))


# ---------------------------------------------------------------------------
if __name__ == "__main__":
    key = jax.random.PRNGKey(0)
    ks = jax.random.split(key, 13)

    N, Cin, H, W = 2, 4, 16, 16
    out_channels, expansion = 4, 4
    mid, cout = out_channels, out_channels * expansion

    # Deterministic synthetic parameters (bias=False per block_config).
    params = {
        "w1": 0.2 * jax.random.normal(ks[0], (Cin, mid), jnp.float32),
        "g1": 1.0 + 0.1 * jax.random.normal(ks[1], (mid,), jnp.float32),
        "b1": 0.1 * jax.random.normal(ks[2], (mid,), jnp.float32),
        "w2": 0.2 * jax.random.normal(ks[3], (3, 3, mid, mid), jnp.float32),  # HWIO
        "g2": 1.0 + 0.1 * jax.random.normal(ks[4], (mid,), jnp.float32),
        "b2": 0.1 * jax.random.normal(ks[5], (mid,), jnp.float32),
        "w3": 0.2 * jax.random.normal(ks[6], (mid, cout), jnp.float32),
        "g3": 1.0 + 0.1 * jax.random.normal(ks[7], (cout,), jnp.float32),
        "b3": 0.1 * jax.random.normal(ks[8], (cout,), jnp.float32),
        "wd": 0.2 * jax.random.normal(ks[9], (Cin, cout), jnp.float32),
        "gd": 1.0 + 0.1 * jax.random.normal(ks[10], (cout,), jnp.float32),
        "bd": 0.1 * jax.random.normal(ks[11], (cout,), jnp.float32),
    }
    x = jax.random.normal(ks[12], (N, Cin, H, W), jnp.float32)

    out = jax.block_until_ready(bottleneck_forward(x, params, down_sample=True))
    ref = jax.block_until_ready(reference_forward(x, params, down_sample=True))

    assert out.shape == (N, cout, H, W), out.shape
    max_err = float(jnp.max(jnp.abs(out - ref)))
    # bf16 MXU operands + bf16 inter-stage tensors vs an all-f32 reference:
    # ~1e-2 typical deviation expected.
    assert max_err < 1e-1, f"max abs error vs reference: {max_err}"

    # TODO(synk): BatchNorm running_mean/running_var updates (train-mode side
    # effect) are not modeled; they do not affect the forward output.
    print("KERNEL_OK")
</pallas_src>

<mosaic_0001>
module attributes {stable_mosaic.version = 11 : i64} {
  func.func @_conv1x1_stats_kernel(%arg0: i32, %arg1: memref<256x128xbf16, #tpu.memory_space<vmem>>, %arg2: memref<128x128xbf16, #tpu.memory_space<vmem>>, %arg3: memref<256x128xbf16, #tpu.memory_space<vmem>>, %arg4: memref<1x128xf32, #tpu.memory_space<vmem>>, %arg5: memref<1x128xf32, #tpu.memory_space<vmem>>) attributes {dimension_semantics = [#tpu.dimension_semantics<arbitrary>], iteration_bounds = array<i64: 2>, scalar_prefetch = 0 : i64, scratch_operands = 0 : i64, tpu.core_type = #tpu.core_type<tc>, window_params = [{transform_indices = @transform_0, window_bounds = array<i64: 256, 128>}, {pipeline_mode = #tpu.pipeline_mode<synchronous>, transform_indices = @transform_1, window_bounds = array<i64: 128, 128>}, {transform_indices = @transform_2, window_bounds = array<i64: 256, 128>}, {pipeline_mode = #tpu.pipeline_mode<synchronous>, transform_indices = @transform_3, window_bounds = array<i64: 1, 128>}, {pipeline_mode = #tpu.pipeline_mode<synchronous>, transform_indices = @transform_4, window_bounds = array<i64: 1, 128>}]} {
    %c0 = arith.constant 0 : index
    %c0_0 = arith.constant 0 : index
    %0 = vector.load %arg1[%c0, %c0_0] : memref<256x128xbf16, #tpu.memory_space<vmem>>, vector<256x128xbf16>
    %c0_1 = arith.constant 0 : index
    %c0_2 = arith.constant 0 : index
    %1 = vector.load %arg2[%c0_1, %c0_2] : memref<128x128xbf16, #tpu.memory_space<vmem>>, vector<128x128xbf16>
    %cst = arith.constant dense<0.000000e+00> : vector<256x128xf32>
    %2 = tpu.matmul %0, %1, %cst {dimension_numbers = #tpu.dot_dimension_numbers<[1], [0], [0], [1], [0, 0, 1, 1], [], []>} : vector<256x128xbf16>, vector<128x128xbf16>, vector<256x128xf32> -> vector<256x128xf32>
    %c0_i32 = arith.constant 0 : i32
    %3 = arith.cmpi eq, %arg0, %c0_i32 : i32
    %4 = arith.extui %3 : i1 to i32
    %c0_i32_3 = arith.constant 0 : i32
    %5 = arith.cmpi ne, %4, %c0_i32_3 : i32
    scf.if %5 {
      %cst_16 = arith.constant 0.000000e+00 : f32
      %19 = vector.broadcast %cst_16 : f32 to vector<1x128xf32>
      %c0_17 = arith.constant 0 : index
      %c0_18 = arith.constant 0 : index
      %20 = vector.load %arg4[%c0_17, %c0_18] : memref<1x128xf32, #tpu.memory_space<vmem>>, vector<1x128xf32>
      tpu.vector_store %arg4[%c0_17, %c0_18], %19 {strides = array<i32>} : memref<1x128xf32, #tpu.memory_space<vmem>>, vector<1x128xf32>,
      %cst_19 = arith.constant 0.000000e+00 : f32
      %21 = vector.broadcast %cst_19 : f32 to vector<1x128xf32>
      %c0_20 = arith.constant 0 : index
      %c0_21 = arith.constant 0 : index
      %22 = vector.load %arg5[%c0_20, %c0_21] : memref<1x128xf32, #tpu.memory_space<vmem>>, vector<1x128xf32>
      tpu.vector_store %arg5[%c0_20, %c0_21], %21 {strides = array<i32>} : memref<1x128xf32, #tpu.memory_space<vmem>>, vector<1x128xf32>,
    } else {
    }
    %c0_4 = arith.constant 0 : index
    %c0_5 = arith.constant 0 : index
    %6 = vector.load %arg4[%c0_4, %c0_5] : memref<1x128xf32, #tpu.memory_space<vmem>>, vector<1x128xf32>
    %cst_6 = arith.constant dense<0.000000e+00> : vector<128xf32>
    %7 = vector.multi_reduction <add>, %2, %cst_6 [0] : vector<256x128xf32> to vector<128xf32>
    %8 = vector.shape_cast %7 : vector<128xf32> to vector<1x128xf32>
    %9 = arith.addf %6, %8 : vector<1x128xf32>
    %c0_7 = arith.constant 0 : index
    %c0_8 = arith.constant 0 : index
    %10 = vector.load %arg4[%c0_7, %c0_8] : memref<1x128xf32, #tpu.memory_space<vmem>>, vector<1x128xf32>
    tpu.vector_store %arg4[%c0_7, %c0_8], %9 {strides = array<i32>} : memref<1x128xf32, #tpu.memory_space<vmem>>, vector<1x128xf32>,
    %c0_9 = arith.constant 0 : index
    %c0_10 = arith.constant 0 : index
    %11 = vector.load %arg5[%c0_9, %c0_10] : memref<1x128xf32, #tpu.memory_space<vmem>>, vector<1x128xf32>
    %12 = arith.mulf %2, %2 : vector<256x128xf32>
    %cst_11 = arith.constant dense<0.000000e+00> : vector<128xf32>
    %13 = vector.multi_reduction <add>, %12, %cst_11 [0] : vector<256x128xf32> to vector<128xf32>
    %14 = vector.shape_cast %13 : vector<128xf32> to vector<1x128xf32>
    %15 = arith.addf %11, %14 : vector<1x128xf32>
    %c0_12 = arith.constant 0 : index
    %c0_13 = arith.constant 0 : index
    %16 = vector.load %arg5[%c0_12, %c0_13] : memref<1x128xf32, #tpu.memory_space<vmem>>, vector<1x128xf32>
    tpu.vector_store %arg5[%c0_12, %c0_13], %15 {strides = array<i32>} : memref<1x128xf32, #tpu.memory_space<vmem>>, vector<1x128xf32>,
    %17 = arith.truncf %2 : vector<256x128xf32> to vector<256x128xbf16>
    %c0_14 = arith.constant 0 : index
    %c0_15 = arith.constant 0 : index
    %18 = vector.load %arg3[%c0_14, %c0_15] : memref<256x128xbf16, #tpu.memory_space<vmem>>, vector<256x128xbf16>
    tpu.vector_store %arg3[%c0_14, %c0_15], %17 {strides = array<i32>} : memref<256x128xbf16, #tpu.memory_space<vmem>>, vector<256x128xbf16>,
    return
  }
  func.func @transform_0(%arg0: i32) -> (i32, i32) {
    %c0_i32 = arith.constant 0 : i32
    %c0_i32_0 = arith.constant 0 : i32
    return %arg0, %c0_i32 : i32, i32
  }
  func.func @transform_1(%arg0: i32) -> (i32, i32) {
    %c0_i32 = arith.constant 0 : i32
    %c0_i32_0 = arith.constant 0 : i32
    %c0_i32_1 = arith.constant 0 : i32
    return %c0_i32, %c0_i32_0 : i32, i32
  }
  func.func @transform_2(%arg0: i32) -> (i32, i32) {
    %c0_i32 = arith.constant 0 : i32
    %c0_i32_0 = arith.constant 0 : i32
    return %arg0, %c0_i32 : i32, i32
  }
  func.func @transform_3(%arg0: i32) -> (i32, i32) {
    %c0_i32 = arith.constant 0 : i32
    %c0_i32_0 = arith.constant 0 : i32
    %c0_i32_1 = arith.constant 0 : i32
    return %c0_i32, %c0_i32_0 : i32, i32
  }
  func.func @transform_4(%arg0: i32) -> (i32, i32) {
    %c0_i32 = arith.constant 0 : i32
    %c0_i32_0 = arith.constant 0 : i32
    %c0_i32_1 = arith.constant 0 : i32
    return %c0_i32, %c0_i32_0 : i32, i32
  }
}

</mosaic_0001>

<llo_original>
// kernel: tpu_custom_call.1
$region0: #{tpu_custom_call.1}
  #allocation0 [shape = 'u32[]', space=smem, size = 0x4, offset = 0x4, fixed_abs, tag = 'smem constant byte address 0x4 - core index']
  #allocation1 [shape = 'u32[72,128]{1,0:T(1,128)}', space=vmem, size = 0x9000, scoped, tag = 'internal scratch']
  %s0 = inlined_call_operand.hbm [shape: bf16[512,128], index: 0, kind: input, shape index: {}]
  %s1 = inlined_call_operand.hbm [shape: bf16[128,128], index: 1, kind: input, shape index: {}]
  %s2 = inlined_call_operand.hbm [shape: bf16[512,128], index: 2, kind: output, shape index: {0}]
  %s3 = inlined_call_operand.hbm [shape: f32[1,128], index: 3, kind: output, shape index: {1}]
  %s4 = inlined_call_operand.hbm [shape: f32[1,128], index: 4, kind: output, shape index: {2}]
  %5 = xla_tuple %s2, %s3, %s4
  %s6 = sld [smem:[#allocation0]]
  $region69: #{tpu_custom_call.1} parent=0
    _
  %s8 = ssub.s32 1, %s6
  %s9 = scalar_select 0, %s8, %s6
  $region1: #{tpu_custom_call.1} parent=0
    #allocation2 [shape = 'u8[131072]{0}', space=vmem, size = 0x20000, scoped, tag = 'input window, operand 0']
    #allocation3 [shape = 's32[2]{0}', space=sflag, size = 0x8, scoped, tag = 'scoped memory for tpu_custom_call.1']
    #allocation4 [shape = 's32[2]{0}', space=sflag, size = 0x8, scoped, tag = 'scoped memory for tpu_custom_call.1']
    #allocation5 [shape = 'u8[32768]{0}', space=vmem, size = 0x8000, scoped, tag = 'input window, operand 1, single buffered']
    #allocation6 [shape = 's32[1]{0}', space=sflag, size = 0x4, scoped, tag = 'scoped memory for tpu_custom_call.1']
    #allocation7 [shape = 'u8[131072]{0}', space=vmem, size = 0x20000, scoped, tag = 'output window, operand 0']
    #allocation8 [shape = 'u8[512]{0}', space=vmem, size = 0x400, scoped, tag = 'output window, operand 1, single buffered']
    #allocation9 [shape = 's32[1]{0}', space=sflag, size = 0x4, scoped, tag = 'scoped memory for tpu_custom_call.1']
    #allocation10 [shape = 'u8[512]{0}', space=vmem, size = 0x400, scoped, tag = 'output window, operand 2, single buffered']
    %10 = vsyncpa [#allocation3], 0
    %s11 = scalar_lea.sflag [#allocation3], 1
    %12 = vsyncpa %s11, 0
    %13 = vsyncpa [#allocation6], 0
    %14 = vsyncpa [#allocation4], 0
    %s15 = scalar_lea.sflag [#allocation4], 1
    %16 = vsyncpa %s15, 0
    %17 = vsyncpa [#allocation9], 0
    loop: start=0, step=1, limit=4
    $region2: #{tpu_custom_call.1} parent=1 // loop_pre_header
      _
    $region3: #{tpu_custom_call.1} parent=1 // loop_header
      %s19 = sphi 0, %s23
      %p20 = scmp.ge.s32.totalorder %s19, 4
      %s29 = sphi 0, %s31
      %s32 = sphi 0, %s29
      %s33 = sphi 0, %s32
      %s49 = sphi 0, %s33
      %s53 = sphi 0, %s53
      %s55 = sphi 0, %s53
      %s56 = sphi 0, %s55
      %s70 = sphi 0, %s56
      %s76 = sphi 0, %s78
      %s79 = sphi 0, %s76
      %s80 = sphi 0, %s79
      %s96 = sphi 0, %s80
      %s100 = sphi 0, %s100
      %s102 = sphi 0, %s100
      %s103 = sphi 0, %s102
      %s117 = sphi 0, %s103
      %s121 = sphi 0, %s121
      %s123 = sphi 0, %s121
      %s124 = sphi 0, %s123
      %s138 = sphi 0, %s124
    $region4: #{tpu_custom_call.1} parent=1 // loop_header_branch
      %22 = sbr.rel (%p20) target = $region8
    $region5: #{tpu_custom_call.1} parent=1 // loop_body
      %s24 = ssub.s32 %s19, 1
      %s25 = ssub.s32 %s19, 2
      %s26 = sadd.s32 %s19, 1
      %s27 = ssub.s32 %s19, %s26
      %p28 = scmp.eq.s32.totalorder %s27, 0
      %s30 = sadd.s32 %s29, 1
      %s31 = scalar_select %p28, %s29, %s30
      %p34 = pneg %p28
      %p35 = scmp.eq.s32.totalorder %s19, 1
      %p36 = por %p34, %p35
      %p37 = scmp.ne.s32.totalorder %s29, %s32
      %p38 = scmp.eq.s32.totalorder %s19, 0
      %p39 = por %p37, %p38
      %p40 = scmp.ne.s32.totalorder %s29, %s32
      %p41 = scmp.eq.s32.totalorder %s24, 1
      %p42 = por %p40, %p41
      %p43 = scmp.ne.s32.totalorder %s32, %s33
      %p44 = scmp.eq.s32.totalorder %s24, 0
      %p45 = por %p43, %p44
      %p46 = scmp.ne.s32.totalorder %s32, %s33
      %p47 = scmp.eq.s32.totalorder %s25, 1
      %p48 = por %p46, %p47
      %p50 = scmp.ne.s32.totalorder %s33, %s49
      %p51 = scmp.eq.s32.totalorder %s25, 0
      %p52 = por %p50, %p51
      %s54 = sadd.s32 %s53, 1
      %p57 = scmp.eq.s32.totalorder %s19, 1
      %p58 = scmp.ne.s32.totalorder %s53, %s55
      %p59 = scmp.eq.s32.totalorder %s19, 0
      %p60 = por %p58, %p59
      %p61 = scmp.ne.s32.totalorder %s53, %s55
      %p62 = scmp.eq.s32.totalorder %s24, 1
      %p63 = por %p61, %p62
      %p64 = scmp.ne.s32.totalorder %s55, %s56
      %p65 = scmp.eq.s32.totalorder %s24, 0
      %p66 = por %p64, %p65
      %p67 = scmp.ne.s32.totalorder %s55, %s56
      %p68 = scmp.eq.s32.totalorder %s25, 1
      %p69 = por %p67, %p68
      %p71 = scmp.ne.s32.totalorder %s56, %s70
      %p72 = scmp.eq.s32.totalorder %s25, 0
      %p73 = por %p71, %p72
      %s74 = ssub.s32 %s19, %s26
      %p75 = scmp.eq.s32.totalorder %s74, 0
      %s77 = sadd.s32 %s76, 1
      %s78 = scalar_select %p75, %s76, %s77
      %p81 = pneg %p75
      %p82 = scmp.eq.s32.totalorder %s19, 1
      %p83 = por %p81, %p82
      %p84 = scmp.ne.s32.totalorder %s76, %s79
      %p85 = scmp.eq.s32.totalorder %s19, 0
      %p86 = por %p84, %p85
      %p87 = scmp.ne.s32.totalorder %s76, %s79
      %p88 = scmp.eq.s32.totalorder %s24, 1
      %p89 = por %p87, %p88
      %p90 = scmp.ne.s32.totalorder %s79, %s80
      %p91 = scmp.eq.s32.totalorder %s24, 0
      %p92 = por %p90, %p91
      %p93 = scmp.ne.s32.totalorder %s79, %s80
      %p94 = scmp.eq.s32.totalorder %s25, 1
      %p95 = por %p93, %p94
      %p97 = scmp.ne.s32.totalorder %s80, %s96
      %p98 = scmp.eq.s32.totalorder %s25, 0
      %p99 = por %p97, %p98
      %s101 = sadd.s32 %s100, 1
      %p104 = scmp.eq.s32.totalorder %s19, 1
      %p105 = scmp.ne.s32.totalorder %s100, %s102
      %p106 = scmp.eq.s32.totalorder %s19, 0
      %p107 = por %p105, %p106
      %p108 = scmp.ne.s32.totalorder %s100, %s102
      %p109 = scmp.eq.s32.totalorder %s24, 1
      %p110 = por %p108, %p109
      %p111 = scmp.ne.s32.totalorder %s102, %s103
      %p112 = scmp.eq.s32.totalorder %s24, 0
      %p113 = por %p111, %p112
      %p114 = scmp.ne.s32.totalorder %s102, %s103
      %p115 = scmp.eq.s32.totalorder %s25, 1
      %p116 = por %p114, %p115
      %p118 = scmp.ne.s32.totalorder %s103, %s117
      %p119 = scmp.eq.s32.totalorder %s25, 0
      %p120 = por %p118, %p119
      %s122 = sadd.s32 %s121, 1
      %p125 = scmp.eq.s32.totalorder %s19, 1
      %p126 = scmp.ne.s32.totalorder %s121, %s123
      %p127 = scmp.eq.s32.totalorder %s19, 0
      %p128 = por %p126, %p127
      %p129 = scmp.ne.s32.totalorder %s121, %s123
      %p130 = scmp.eq.s32.totalorder %s24, 1
      %p131 = por %p129, %p130
      %p132 = scmp.ne.s32.totalorder %s123, %s124
      %p133 = scmp.eq.s32.totalorder %s24, 0
      %p134 = por %p132, %p133
      %p135 = scmp.ne.s32.totalorder %s123, %s124
      %p136 = scmp.eq.s32.totalorder %s25, 1
      %p137 = por %p135, %p136
      %p139 = scmp.ne.s32.totalorder %s124, %s138
      %p140 = scmp.eq.s32.totalorder %s25, 0
      %p141 = por %p139, %p140
      %p142 = scmp.le.s32.totalorder 1, %s19
      %p143 = scmp.lt.s32.totalorder %s19, 3
      %p144 = pnand %p142, %p143
      %p145 = pneg %p144
      // Predicated region
      $region9: #{tpu_custom_call.1} parent=5 // pred_check
        _
      $region10: #{tpu_custom_call.1} parent=5 // pred_check_branch
        %147 = sbr.rel (%p144) target = $region12
      $region11: #{tpu_custom_call.1} parent=5 // pred_region
        %s148 = ssub.s32 %s19, 1
        // Predicated region
        $region13: #{tpu_custom_call.1} parent=11 // pred_check
          %p149 = pneg %p66
        $region14: #{tpu_custom_call.1} parent=11 // pred_check_branch
          %151 = sbr.rel (%p149) target = $region16
        $region15: #{tpu_custom_call.1} parent=11 // pred_region
          %153 = vsyncadd [#allocation6], 0
          %s154 = sshll.u32 %s1, 4
          %s155 = int_to_ptr.hbm [resolvable:$true] %s154
          %s156 = sshll.u32 [#allocation5], 4
          %s157 = int_to_ptr.vmem [resolvable:$true] %s156
          %162 = dma.hbm_to_vmem [thread:$0]  %s155, 1024, %s157, [#allocation6], 64, 64, 4
        $region16: #{tpu_custom_call.1} parent=11 // pred_fallthru
          _
      $region12: #{tpu_custom_call.1} parent=5 // pred_fallthru
        _
      %p163 = scmp.lt.s32.totalorder %s19, 2
      // Predicated region
      $region17: #{tpu_custom_call.1} parent=5 // pred_check
        %p164 = pneg %p163
      $region18: #{tpu_custom_call.1} parent=5 // pred_check_branch
        %166 = sbr.rel (%p164) target = $region20
      $region19: #{tpu_custom_call.1} parent=5 // pred_region
        // Predicated region
        $region21: #{tpu_custom_call.1} parent=19 // pred_check
          %p167 = pneg %p39
        $region22: #{tpu_custom_call.1} parent=19 // pred_check_branch
          %169 = sbr.rel (%p167) target = $region24
        $region23: #{tpu_custom_call.1} parent=19 // pred_region
          %s170 = sand.u32 %s29, 1
          %s171 = scalar_lea.sflag [#allocation3], %s170
          %s172 = sand.u32 %s29, 1
          %s173 = smul.addr %s172, 128
          %s174 = scalar_lea.vmem [#allocation2], %s173
          %s175 = smul.u32 32, %s19
          %177 = vsyncadd %s171, 0
          %s178 = smul.addr %s175, 4
          %s179 = scalar_lea.hbm %s0, %s178
          %s180 = sshll.u32 %s179, 4
          %s181 = int_to_ptr.hbm [resolvable:$true] %s180
          %s182 = sshll.u32 %s174, 4
          %s183 = int_to_ptr.vmem [resolvable:$true] %s182
          %188 = dma.hbm_to_vmem [thread:$0]  %s181, 2048, %s183, %s171, 64, 64, 4
        $region24: #{tpu_custom_call.1} parent=19 // pred_fallthru
          _
      $region20: #{tpu_custom_call.1} parent=5 // pred_fallthru
        _
      %p189 = scmp.le.s32.totalorder 1, %s19
      %p190 = scmp.lt.s32.totalorder %s19, 3
      %p191 = pnand %p189, %p190
      %p192 = pneg %p191
      // Predicated region
      $region25: #{tpu_custom_call.1} parent=5 // pred_check
        _
      $region26: #{tpu_custom_call.1} parent=5 // pred_check_branch
        %194 = sbr.rel (%p191) target = $region28
      $region27: #{tpu_custom_call.1} parent=5 // pred_region
        %s195 = ssub.s32 %s19, 1
        %s196 = sand.u32 %s32, 1
        %s197 = scalar_lea.sflag [#allocation3], %s196
        %s198 = sand.u32 %s32, 1
        %s199 = smul.addr %s198, 128
        %s200 = scalar_lea.vmem [#allocation2], %s199
        // Predicated region
        $region29: #{tpu_custom_call.1} parent=27 // pred_check
          %p201 = pneg %p45
        $region30: #{tpu_custom_call.1} parent=27 // pred_check_branch
          %203 = sbr.rel (%p201) target = $region32
        $region31: #{tpu_custom_call.1} parent=27 // pred_region
          %205 = dma.done %s197, 2048
        $region32: #{tpu_custom_call.1} parent=27 // pred_fallthru
          _
        // Predicated region
        $region33: #{tpu_custom_call.1} parent=27 // pred_check
          %p206 = pneg %p66
        $region34: #{tpu_custom_call.1} parent=27 // pred_check_branch
          %208 = sbr.rel (%p206) target = $region36
        $region35: #{tpu_custom_call.1} parent=27 // pred_region
          %210 = dma.done [#allocation6], 1024
        $region36: #{tpu_custom_call.1} parent=27 // pred_fallthru
          _
        %s211 = sand.u32 %s32, 1
        %s212 = scalar_lea.sflag [#allocation3], %s211
        %s213 = sand.u32 %s32, 1
        %s214 = smul.addr %s213, 128
        %s215 = scalar_lea.vmem [#allocation2], %s214
        %p216 = pneg %p45
        %p217 = pneg %p42
        %p218 = pneg %p66
        %p219 = pneg %p63
        %p220 = pneg %p92
        %p221 = pneg %p89
        %s222 = sand.u32 %s79, 1
        %s223 = scalar_lea.sflag [#allocation4], %s222
        %s224 = sand.u32 %s79, 1
        %s225 = smul.addr %s224, 128
        %s226 = scalar_lea.vmem [#allocation7], %s225
        %p227 = pneg %p113
        %p228 = pneg %p110
        %p229 = pneg %p134
        %p230 = pneg %p131
        %s231 = smul.u32 32, %s24
        %s232 = smul.u32 32, %s24
        %v233 = vld [vmem:[%s200] sm:$0xf]
        %v234 = vld [vmem:[%s200 + $0x4] sm:$0xf]
        %v235 = vld [vmem:[%s200 + $0x8] sm:$0xf]
        %v236 = vld [vmem:[%s200 + $0xc] sm:$0xf]
        %v237 = vld [vmem:[%s200 + $0x10] sm:$0xf]
        %v238 = vld [vmem:[%s200 + $0x14] sm:$0xf]
        %v239 = vld [vmem:[%s200 + $0x18] sm:$0xf]
        %v240 = vld [vmem:[%s200 + $0x1c] sm:$0xf]
        %v241 = vld [vmem:[%s200 + $0x20] sm:$0xf]
        %v242 = vld [vmem:[%s200 + $0x24] sm:$0xf]
        %v243 = vld [vmem:[%s200 + $0x28] sm:$0xf]
        %v244 = vld [vmem:[%s200 + $0x2c] sm:$0xf]
        %v245 = vld [vmem:[%s200 + $0x30] sm:$0xf]
        %v246 = vld [vmem:[%s200 + $0x34] sm:$0xf]
        %v247 = vld [vmem:[%s200 + $0x38] sm:$0xf]
        %v248 = vld [vmem:[%s200 + $0x3c] sm:$0xf]
        %v249 = vld [vmem:[%s200 + $0x40] sm:$0xf]
        %v250 = vld [vmem:[%s200 + $0x44] sm:$0xf]
        %v251 = vld [vmem:[%s200 + $0x48] sm:$0xf]
        %v252 = vld [vmem:[%s200 + $0x4c] sm:$0xf]
        %v253 = vld [vmem:[%s200 + $0x50] sm:$0xf]
        %v254 = vld [vmem:[%s200 + $0x54] sm:$0xf]
        %v255 = vld [vmem:[%s200 + $0x58] sm:$0xf]
        %v256 = vld [vmem:[%s200 + $0x5c] sm:$0xf]
        %v257 = vld [vmem:[%s200 + $0x60] sm:$0xf]
        %v258 = vld [vmem:[%s200 + $0x64] sm:$0xf]
        %v259 = vld [vmem:[%s200 + $0x68] sm:$0xf]
        %v260 = vld [vmem:[%s200 + $0x6c] sm:$0xf]
        %v261 = vld [vmem:[%s200 + $0x70] sm:$0xf]
        %v262 = vld [vmem:[%s200 + $0x74] sm:$0xf]
        %v263 = vld [vmem:[%s200 + $0x78] sm:$0xf]
        %v264 = vld [vmem:[%s200 + $0x7c] sm:$0xf]
        %v265 = vld [vmem:[#allocation5] sm:$0xf]
        %v266 = vld [vmem:[#allocation5 + $0x4] sm:$0xf]
        %v267 = vld [vmem:[#allocation5 + $0x8] sm:$0xf]
        %v268 = vld [vmem:[#allocation5 + $0xc] sm:$0xf]
        %v269 = vld [vmem:[#allocation5 + $0x10] sm:$0xf]
        %v270 = vld [vmem:[#allocation5 + $0x14] sm:$0xf]
        %v271 = vld [vmem:[#allocation5 + $0x18] sm:$0xf]
        %v272 = vld [vmem:[#allocation5 + $0x1c] sm:$0xf]
        %v273 = vld [vmem:[#allocation5 + $0x20] sm:$0xf]
        %v274 = vld [vmem:[#allocation5 + $0x24] sm:$0xf]
        %v275 = vld [vmem:[#allocation5 + $0x28] sm:$0xf]
        %v276 = vld [vmem:[#allocation5 + $0x2c] sm:$0xf]
        %v277 = vld [vmem:[#allocation5 + $0x30] sm:$0xf]
        %v278 = vld [vmem:[#allocation5 + $0x34] sm:$0xf]
        %v279 = vld [vmem:[#allocation5 + $0x38] sm:$0xf]
        %v280 = vld [vmem:[#allocation5 + $0x3c] sm:$0xf]
        %v313 = vunpack.c.l.b16 %v233
        %v314 = vunpack.c.l.b16 %v234
        %v315 = vunpack.c.l.b16 %v235
        %v316 = vunpack.c.l.b16 %v236
        %v317 = vunpack.c.l.b16 %v237
        %v318 = vunpack.c.l.b16 %v238
        %v319 = vunpack.c.l.b16 %v239
        %v320 = vunpack.c.l.b16 %v240
        %v321 = vunpack.c.l.b16 %v241
        %v322 = vunpack.c.l.b16 %v242
        %v323 = vunpack.c.l.b16 %v243
        %v324 = vunpack.c.l.b16 %v244
        %v325 = vunpack.c.l.b16 %v245
        %v326 = vunpack.c.l.b16 %v246
        %v327 = vunpack.c.l.b16 %v247
        %v328 = vunpack.c.l.b16 %v248
        %v329 = vunpack.c.l.b16 %v249
        %v330 = vunpack.c.l.b16 %v250
        %v331 = vunpack.c.l.b16 %v251
        %v332 = vunpack.c.l.b16 %v252
        %v333 = vunpack.c.l.b16 %v253
        %v334 = vunpack.c.l.b16 %v254
        %v335 = vunpack.c.l.b16 %v255
        %v336 = vunpack.c.l.b16 %v256
        %v337 = vunpack.c.l.b16 %v257
        %v338 = vunpack.c.l.b16 %v258
        %v339 = vunpack.c.l.b16 %v259
        %v340 = vunpack.c.l.b16 %v260
        %v341 = vunpack.c.l.b16 %v261
        %v342 = vunpack.c.l.b16 %v262
        %v343 = vunpack.c.l.b16 %v263
        %v344 = vunpack.c.l.b16 %v264
        %v345 = vpack.c.b16 %v314, %v313
        %v346 = vpack.c.b16 %v316, %v315
        %v347 = vpack.c.b16 %v318, %v317
        %v348 = vpack.c.b16 %v320, %v319
        %v349 = vpack.c.b16 %v322, %v321
        %v350 = vpack.c.b16 %v324, %v323
        %v351 = vpack.c.b16 %v326, %v325
        %v352 = vpack.c.b16 %v328, %v327
        %v353 = vpack.c.b16 %v330, %v329
        %v354 = vpack.c.b16 %v332, %v331
        %v355 = vpack.c.b16 %v334, %v333
        %v356 = vpack.c.b16 %v336, %v335
        %v357 = vpack.c.b16 %v338, %v337
        %v358 = vpack.c.b16 %v340, %v339
        %v359 = vpack.c.b16 %v342, %v341
        %v360 = vpack.c.b16 %v344, %v343
        %v393 = vunpack.c.l.b16 %v265
        %v394 = vunpack.c.l.b16 %v266
        %v395 = vunpack.c.l.b16 %v267
        %v396 = vunpack.c.l.b16 %v268
        %v397 = vunpack.c.l.b16 %v269
        %v398 = vunpack.c.l.b16 %v270
        %v399 = vunpack.c.l.b16 %v271
        %v400 = vunpack.c.l.b16 %v272
        %v401 = vunpack.c.l.b16 %v273
        %v402 = vunpack.c.l.b16 %v274
        %v403 = vunpack.c.l.b16 %v275
        %v404 = vunpack.c.l.b16 %v276
        %v405 = vunpack.c.l.b16 %v277
        %v406 = vunpack.c.l.b16 %v278
        %v407 = vunpack.c.l.b16 %v279
        %v408 = vunpack.c.l.b16 %v280
        %v409 = vpack.c.b16 %v394, %v393
        %v410 = vpack.c.b16 %v396, %v395
        %v411 = vpack.c.b16 %v398, %v397
        %v412 = vpack.c.b16 %v400, %v399
        %v413 = vpack.c.b16 %v402, %v401
        %v414 = vpack.c.b16 %v404, %v403
        %v415 = vpack.c.b16 %v406, %v405
        %v416 = vpack.c.b16 %v408, %v407
        %425 = vmatpush.bf16.msra.mxu0 %v416
        %426 = vmatpush.bf16.msra.mxu0 %v415
        %427 = vmatpush.bf16.msra.mxu0 %v414
        %428 = vmatpush.bf16.msra.mxu0 %v413
        %429 = vmatpush.bf16.msra.mxu0 %v412
        %430 = vmatpush.bf16.msra.mxu0 %v411
        %431 = vmatpush.bf16.msra.mxu0 %v410
        %432 = vmatpush.bf16.msra.mxu0 %v409
        %433 = vmatmul.bf16.gmra.mxu0 %v345
        %v434 = vpop.f32.mrf.mxu0
        %v435 = vadd.f32 0.0, %v434
        %v436 = vpop.f32.mrf.mxu0
        %v437 = vadd.f32 0.0, %v436
        %438 = vmatmul.bf16.gmra.mxu0 %v346
        %v439 = vpop.f32.mrf.mxu0
        %v440 = vadd.f32 0.0, %v439
        %v441 = vpop.f32.mrf.mxu0
        %v442 = vadd.f32 0.0, %v441
        %443 = vmatmul.bf16.gmra.mxu0 %v347
        %v444 = vpop.f32.mrf.mxu0
        %v445 = vadd.f32 0.0, %v444
        %v446 = vpop.f32.mrf.mxu0
        %v447 = vadd.f32 0.0, %v446
        %448 = vmatmul.bf16.gmra.mxu0 %v348
        %v449 = vpop.f32.mrf.mxu0
        %v450 = vadd.f32 0.0, %v449
        %v451 = vpop.f32.mrf.mxu0
        %v452 = vadd.f32 0.0, %v451
        %453 = vmatmul.bf16.gmra.mxu0 %v349
        %v454 = vpop.f32.mrf.mxu0
        %v455 = vadd.f32 0.0, %v454
        %v456 = vpop.f32.mrf.mxu0
        %v457 = vadd.f32 0.0, %v456
        %458 = vmatmul.bf16.gmra.mxu0 %v350
        %v459 = vpop.f32.mrf.mxu0
        %v460 = vadd.f32 0.0, %v459
        %v461 = vpop.f32.mrf.mxu0
        %v462 = vadd.f32 0.0, %v461
        %463 = vmatmul.bf16.gmra.mxu0 %v351
        %v464 = vpop.f32.mrf.mxu0
        %v465 = vadd.f32 0.0, %v464
        %v466 = vpop.f32.mrf.mxu0
        %v467 = vadd.f32 0.0, %v466
        %468 = vmatmul.bf16.gmra.mxu0 %v352
        %v469 = vpop.f32.mrf.mxu0
        %v470 = vadd.f32 0.0, %v469
        %v471 = vpop.f32.mrf.mxu0
        %v472 = vadd.f32 0.0, %v471
        %473 = vmatmul.bf16.gmra.mxu0 %v353
        %v474 = vpop.f32.mrf.mxu0
        %v475 = vadd.f32 0.0, %v474
        %v476 = vpop.f32.mrf.mxu0
        %v477 = vadd.f32 0.0, %v476
        %478 = vmatmul.bf16.gmra.mxu0 %v354
        %v479 = vpop.f32.mrf.mxu0
        %v480 = vadd.f32 0.0, %v479
        %v481 = vpop.f32.mrf.mxu0
        %v482 = vadd.f32 0.0, %v481
        %483 = vmatmul.bf16.gmra.mxu0 %v355
        %v484 = vpop.f32.mrf.mxu0
        %v485 = vadd.f32 0.0, %v484
        %v486 = vpop.f32.mrf.mxu0
        %v487 = vadd.f32 0.0, %v486
        %488 = vmatmul.bf16.gmra.mxu0 %v356
        %v489 = vpop.f32.mrf.mxu0
        %v490 = vadd.f32 0.0, %v489
        %v491 = vpop.f32.mrf.mxu0
        %v492 = vadd.f32 0.0, %v491
        %493 = vmatmul.bf16.gmra.mxu0 %v357
        %v494 = vpop.f32.mrf.mxu0
        %v495 = vadd.f32 0.0, %v494
        %v496 = vpop.f32.mrf.mxu0
        %v497 = vadd.f32 0.0, %v496
        %498 = vmatmul.bf16.gmra.mxu0 %v358
        %v499 = vpop.f32.mrf.mxu0
        %v500 = vadd.f32 0.0, %v499
        %v501 = vpop.f32.mrf.mxu0
        %v502 = vadd.f32 0.0, %v501
        %503 = vmatmul.bf16.gmra.mxu0 %v359
        %v504 = vpop.f32.mrf.mxu0
        %v505 = vadd.f32 0.0, %v504
        %v506 = vpop.f32.mrf.mxu0
        %v507 = vadd.f32 0.0, %v506
        %508 = vmatmul.bf16.gmra.mxu0 %v360
        %v509 = vpop.f32.mrf.mxu0
        %v510 = vadd.f32 0.0, %v509
        %v511 = vpop.f32.mrf.mxu0
        %v512 = vadd.f32 0.0, %v511
        %513 = vdwg.mxu0
        %p514 = scmp.eq.s32.totalorder %s24, 0
        // Predicated region
        $region37: #{tpu_custom_call.1} parent=27 // pred_check
          %p515 = pneg %p514
        $region38: #{tpu_custom_call.1} parent=27 // pred_check_branch
          %517 = sbr.rel (%p515) target = $region40
        $region39: #{tpu_custom_call.1} parent=27 // pred_region
          %518 = vst [vmem:[#allocation8] sm:$0x1] 0.0
          %519 = vst [vmem:[#allocation10] sm:$0x1] 0.0
        $region40: #{tpu_custom_call.1} parent=27 // pred_fallthru
          _
        %v520 = vld [vmem:[#allocation8] sm:$0x1]
        %v521 = vadd.f32 %v435, %v437
        %v522 = vadd.f32 %v521, %v440
        %v523 = vadd.f32 %v522, %v442
        %v524 = vadd.f32 %v523, %v445
        %v525 = vadd.f32 %v524, %v447
        %v526 = vadd.f32 %v525, %v450
        %v527 = vadd.f32 %v526, %v452
        %v528 = vadd.f32 %v527, %v455
        %v529 = vadd.f32 %v528, %v457
        %v530 = vadd.f32 %v529, %v460
        %v531 = vadd.f32 %v530, %v462
        %v532 = vadd.f32 %v531, %v465
        %v533 = vadd.f32 %v532, %v467
        %v534 = vadd.f32 %v533, %v470
        %v535 = vadd.f32 %v534, %v472
        %v536 = vadd.f32 %v535, %v475
        %v537 = vadd.f32 %v536, %v477
        %v538 = vadd.f32 %v537, %v480
        %v539 = vadd.f32 %v538, %v482
        %v540 = vadd.f32 %v539, %v485
        %v541 = vadd.f32 %v540, %v487
        %v542 = vadd.f32 %v541, %v490
        %v543 = vadd.f32 %v542, %v492
        %v544 = vadd.f32 %v543, %v495
        %v545 = vadd.f32 %v544, %v497
        %v546 = vadd.f32 %v545, %v500
        %v547 = vadd.f32 %v546, %v502
        %v548 = vadd.f32 %v547, %v505
        %v549 = vadd.f32 %v548, %v507
        %v550 = vadd.f32 %v549, %v510
        %v551 = vadd.f32 %v550, %v512
        %v552 = vrot.slane %v551, 4
        %v553 = vadd.f32 %v551, %v552
        %v554 = vrot.slane %v553, 2
        %v555 = vadd.f32 %v553, %v554
        %v556 = vrot.slane %v555, 1
        %v557 = vadd.f32 %v555, %v556
        %v558 = vadd.f32 %v520, %v557
        %559 = vst [vmem:[#allocation8] sm:$0x1] %v558
        %v560 = vld [vmem:[#allocation10] sm:$0x1]
        %v561 = vmul.f32 %v435, %v435
        %v562 = vmul.f32 %v437, %v437
        %v563 = vmul.f32 %v440, %v440
        %v564 = vmul.f32 %v442, %v442
        %v565 = vmul.f32 %v445, %v445
        %v566 = vmul.f32 %v447, %v447
        %v567 = vmul.f32 %v450, %v450
        %v568 = vmul.f32 %v452, %v452
        %v569 = vmul.f32 %v455, %v455
        %v570 = vmul.f32 %v457, %v457
        %v571 = vmul.f32 %v460, %v460
        %v572 = vmul.f32 %v462, %v462
        %v573 = vmul.f32 %v465, %v465
        %v574 = vmul.f32 %v467, %v467
        %v575 = vmul.f32 %v470, %v470
        %v576 = vmul.f32 %v472, %v472
        %v577 = vmul.f32 %v475, %v475
        %v578 = vmul.f32 %v477, %v477
        %v579 = vmul.f32 %v480, %v480
        %v580 = vmul.f32 %v482, %v482
        %v581 = vmul.f32 %v485, %v485
        %v582 = vmul.f32 %v487, %v487
        %v583 = vmul.f32 %v490, %v490
        %v584 = vmul.f32 %v492, %v492
        %v585 = vmul.f32 %v495, %v495
        %v586 = vmul.f32 %v497, %v497
        %v587 = vmul.f32 %v500, %v500
        %v588 = vmul.f32 %v502, %v502
        %v589 = vmul.f32 %v505, %v505
        %v590 = vmul.f32 %v507, %v507
        %v591 = vmul.f32 %v510, %v510
        %v592 = vmul.f32 %v512, %v512
        %v593 = vadd.f32 %v561, %v562
        %v594 = vadd.f32 %v593, %v563
        %v595 = vadd.f32 %v594, %v564
        %v596 = vadd.f32 %v595, %v565
        %v597 = vadd.f32 %v596, %v566
        %v598 = vadd.f32 %v597, %v567
        %v599 = vadd.f32 %v598, %v568
        %v600 = vadd.f32 %v599, %v569
        %v601 = vadd.f32 %v600, %v570
        %v602 = vadd.f32 %v601, %v571
        %v603 = vadd.f32 %v602, %v572
        %v604 = vadd.f32 %v603, %v573
        %v605 = vadd.f32 %v604, %v574
        %v606 = vadd.f32 %v605, %v575
        %v607 = vadd.f32 %v606, %v576
        %v608 = vadd.f32 %v607, %v577
        %v609 = vadd.f32 %v608, %v578
        %v610 = vadd.f32 %v609, %v579
        %v611 = vadd.f32 %v610, %v580
        %v612 = vadd.f32 %v611, %v581
        %v613 = vadd.f32 %v612, %v582
        %v614 = vadd.f32 %v613, %v583
        %v615 = vadd.f32 %v614, %v584
        %v616 = vadd.f32 %v615, %v585
        %v617 = vadd.f32 %v616, %v586
        %v618 = vadd.f32 %v617, %v587
        %v619 = vadd.f32 %v618, %v588
        %v620 = vadd.f32 %v619, %v589
        %v621 = vadd.f32 %v620, %v590
        %v622 = vadd.f32 %v621, %v591
        %v623 = vadd.f32 %v622, %v592
        %v624 = vrot.slane %v623, 4
        %v625 = vadd.f32 %v623, %v624
        %v626 = vrot.slane %v625, 2
        %v627 = vadd.f32 %v625, %v626
        %v628 = vrot.slane %v627, 1
        %v629 = vadd.f32 %v627, %v628
        %v630 = vadd.f32 %v560, %v629
        %631 = vst [vmem:[#allocation10] sm:$0x1] %v630
        %v632 = vpack.c.bf16 %v435, %v435
        %v633 = vpack.c.bf16 %v437, %v437
        %v634 = vpack.c.bf16 %v440, %v440
        %v635 = vpack.c.bf16 %v442, %v442
        %v636 = vpack.c.bf16 %v445, %v445
        %v637 = vpack.c.bf16 %v447, %v447
        %v638 = vpack.c.bf16 %v450, %v450
        %v639 = vpack.c.bf16 %v452, %v452
        %v640 = vpack.c.bf16 %v455, %v455
        %v641 = vpack.c.bf16 %v457, %v457
        %v642 = vpack.c.bf16 %v460, %v460
        %v643 = vpack.c.bf16 %v462, %v462
        %v644 = vpack.c.bf16 %v465, %v465
        %v645 = vpack.c.bf16 %v467, %v467
        %v646 = vpack.c.bf16 %v470, %v470
        %v647 = vpack.c.bf16 %v472, %v472
        %v648 = vpack.c.bf16 %v475, %v475
        %v649 = vpack.c.bf16 %v477, %v477
        %v650 = vpack.c.bf16 %v480, %v480
        %v651 = vpack.c.bf16 %v482, %v482
        %v652 = vpack.c.bf16 %v485, %v485
        %v653 = vpack.c.bf16 %v487, %v487
        %v654 = vpack.c.bf16 %v490, %v490
        %v655 = vpack.c.bf16 %v492, %v492
        %v656 = vpack.c.bf16 %v495, %v495
        %v657 = vpack.c.bf16 %v497, %v497
        %v658 = vpack.c.bf16 %v500, %v500
        %v659 = vpack.c.bf16 %v502, %v502
        %v660 = vpack.c.bf16 %v505, %v505
        %v661 = vpack.c.bf16 %v507, %v507
        %v662 = vpack.c.bf16 %v510, %v510
        %v663 = vpack.c.bf16 %v512, %v512
        %664 = vst [vmem:[%s226] sm:$0xf] %v632
        %665 = vst [vmem:[%s226 + $0x4] sm:$0xf] %v633
        %666 = vst [vmem:[%s226 + $0x8] sm:$0xf] %v634
        %667 = vst [vmem:[%s226 + $0xc] sm:$0xf] %v635
        %668 = vst [vmem:[%s226 + $0x10] sm:$0xf] %v636
        %669 = vst [vmem:[%s226 + $0x14] sm:$0xf] %v637
        %670 = vst [vmem:[%s226 + $0x18] sm:$0xf] %v638
        %671 = vst [vmem:[%s226 + $0x1c] sm:$0xf] %v639
        %672 = vst [vmem:[%s226 + $0x20] sm:$0xf] %v640
        %673 = vst [vmem:[%s226 + $0x24] sm:$0xf] %v641
        %674 = vst [vmem:[%s226 + $0x28] sm:$0xf] %v642
        %675 = vst [vmem:[%s226 + $0x2c] sm:$0xf] %v643
        %676 = vst [vmem:[%s226 + $0x30] sm:$0xf] %v644
        %677 = vst [vmem:[%s226 + $0x34] sm:$0xf] %v645
        %678 = vst [vmem:[%s226 + $0x38] sm:$0xf] %v646
        %679 = vst [vmem:[%s226 + $0x3c] sm:$0xf] %v647
        %680 = vst [vmem:[%s226 + $0x40] sm:$0xf] %v648
        %681 = vst [vmem:[%s226 + $0x44] sm:$0xf] %v649
        %682 = vst [vmem:[%s226 + $0x48] sm:$0xf] %v650
        %683 = vst [vmem:[%s226 + $0x4c] sm:$0xf] %v651
        %684 = vst [vmem:[%s226 + $0x50] sm:$0xf] %v652
        %685 = vst [vmem:[%s226 + $0x54] sm:$0xf] %v653
        %686 = vst [vmem:[%s226 + $0x58] sm:$0xf] %v654
        %687 = vst [vmem:[%s226 + $0x5c] sm:$0xf] %v655
        %688 = vst [vmem:[%s226 + $0x60] sm:$0xf] %v656
        %689 = vst [vmem:[%s226 + $0x64] sm:$0xf] %v657
        %690 = vst [vmem:[%s226 + $0x68] sm:$0xf] %v658
        %691 = vst [vmem:[%s226 + $0x6c] sm:$0xf] %v659
        %692 = vst [vmem:[%s226 + $0x70] sm:$0xf] %v660
        %693 = vst [vmem:[%s226 + $0x74] sm:$0xf] %v661
        %694 = vst [vmem:[%s226 + $0x78] sm:$0xf] %v662
        %695 = vst [vmem:[%s226 + $0x7c] sm:$0xf] %v663
        %s696 = sand.u32 %s79, 1
        %s697 = scalar_lea.sflag [#allocation4], %s696
        %s698 = sand.u32 %s79, 1
        %s699 = smul.addr %s698, 128
        %s700 = scalar_lea.vmem [#allocation7], %s699
        // Predicated region
        $region41: #{tpu_custom_call.1} parent=27 // pred_check
          %p701 = pneg %p89
        $region42: #{tpu_custom_call.1} parent=27 // pred_check_branch
          %703 = sbr.rel (%p701) target = $region44
        $region43: #{tpu_custom_call.1} parent=27 // pred_region
          %s704 = smul.u32 32, %s24
          %706 = vsyncadd %s697, 0
          %s707 = smul.addr %s704, 4
          %s708 = scalar_lea.hbm %s2, %s707
          %s709 = sshll.u32 %s700, 4
          %s710 = int_to_ptr.vmem [resolvable:$true] %s709
          %s711 = sshll.u32 %s708, 4
          %s712 = int_to_ptr.hbm [resolvable:$true] %s711
          %717 = dma.vmem_to_hbm [thread:$0]  %s710, 2048, %s712, %s697, 64, 64, 4
        $region44: #{tpu_custom_call.1} parent=27 // pred_fallthru
          _
        // Predicated region
        $region45: #{tpu_custom_call.1} parent=27 // pred_check
          %p718 = pneg %p110
        $region46: #{tpu_custom_call.1} parent=27 // pred_check_branch
          %720 = sbr.rel (%p718) target = $region48
        $region47: #{tpu_custom_call.1} parent=27 // pred_region
          %722 = vsyncadd [#allocation9], 0
          %s724 = sshll.u32 [#allocation8], 4
          %s725 = int_to_ptr.vmem [resolvable:$true] %s724
          %s726 = sshll.u32 %s3, 4
          %s727 = int_to_ptr.hbm [resolvable:$true] %s726
          %729 = dma.vmem_to_hbm [thread:$0]  %s725, 16, %s727, [#allocation9]
        $region48: #{tpu_custom_call.1} parent=27 // pred_fallthru
          _
        // Predicated region
        $region49: #{tpu_custom_call.1} parent=27 // pred_check
          %p730 = pneg %p131
        $region50: #{tpu_custom_call.1} parent=27 // pred_check_branch
          %732 = sbr.rel (%p730) target = $region52
        $region51: #{tpu_custom_call.1} parent=27 // pred_region
          %734 = vsyncadd [#allocation9], 0
          %s736 = sshll.u32 [#allocation10], 4
          %s737 = int_to_ptr.vmem [resolvable:$true] %s736
          %s738 = sshll.u32 %s4, 4
          %s739 = int_to_ptr.hbm [resolvable:$true] %s738
          %741 = dma.vmem_to_hbm [thread:$0]  %s737, 16, %s739, [#allocation9]
        $region52: #{tpu_custom_call.1} parent=27 // pred_fallthru
          _
        // Predicated region
        $region53: #{tpu_custom_call.1} parent=27 // pred_check
          %p742 = pneg %p110
        $region54: #{tpu_custom_call.1} parent=27 // pred_check_branch
          %744 = sbr.rel (%p742) target = $region56
        $region55: #{tpu_custom_call.1} parent=27 // pred_region
          %746 = dma.done [#allocation9], 16
        $region56: #{tpu_custom_call.1} parent=27 // pred_fallthru
          _
        // Predicated region
        $region57: #{tpu_custom_call.1} parent=27 // pred_check
          %p747 = pneg %p131
        $region58: #{tpu_custom_call.1} parent=27 // pred_check_branch
          %749 = sbr.rel (%p747) target = $region60
        $region59: #{tpu_custom_call.1} parent=27 // pred_region
          %751 = dma.done [#allocation9], 16
        $region60: #{tpu_custom_call.1} parent=27 // pred_fallthru
          _
      $region28: #{tpu_custom_call.1} parent=5 // pred_fallthru
        _
      %p752 = scmp.le.s32.totalorder 2, %s19
      // Predicated region
      $region61: #{tpu_custom_call.1} parent=5 // pred_check
        %p753 = pneg %p752
      $region62: #{tpu_custom_call.1} parent=5 // pred_check_branch
        %755 = sbr.rel (%p753) target = $region64
      $region63: #{tpu_custom_call.1} parent=5 // pred_region
        %s756 = ssub.s32 %s19, 2
        // Predicated region
        $region65: #{tpu_custom_call.1} parent=63 // pred_check
          %p757 = pneg %p95
        $region66: #{tpu_custom_call.1} parent=63 // pred_check_branch
          %759 = sbr.rel (%p757) target = $region68
        $region67: #{tpu_custom_call.1} parent=63 // pred_region
          %s760 = sand.u32 %s80, 1
          %s761 = scalar_lea.sflag [#allocation4], %s760
          %s762 = sand.u32 %s80, 1
          %s763 = smul.addr %s762, 128
          %s764 = scalar_lea.vmem [#allocation7], %s763
          %766 = dma.done %s761, 2048
        $region68: #{tpu_custom_call.1} parent=63 // pred_fallthru
          _
      $region64: #{tpu_custom_call.1} parent=5 // pred_fallthru
        _
    $region6: #{tpu_custom_call.1} parent=1 // loop_footer
      %s23 = sadd.s32 1, %s19
    $region7: #{tpu_custom_call.1} parent=1 // loop_footer_branch
      %18 = sbr.rel target = $region3
    $region8: #{tpu_custom_call.1} parent=1 // loop_exit
      _
    %767 = vsyncpa [#allocation3], 1
    %s768 = scalar_lea.sflag [#allocation3], 1
    %769 = vsyncpa %s768, 1
    %770 = vsyncpa [#allocation6], 1
    %771 = vsyncpa [#allocation4], 1
    %s772 = scalar_lea.sflag [#allocation4], 1
    %773 = vsyncpa %s772, 1
    %774 = vsyncpa [#allocation9], 1

</llo_original>
